<compile_context>
chip_gen: v5e
topology: v5e:2x2
jax: 0.10.0
libtpu: 0.0.40
codegen_flags: <defaults>
</compile_context>

<pallas_src>
import functools

import jax
import jax.numpy as jnp
from jax.experimental import pallas as pl
from jax.experimental.pallas import tpu as pltpu

_NEG_INF = -1e30  # finite "minus infinity" (avoids inf-inf NaNs in online softmax)


def _round_up(x, m):
    return (x + m - 1) // m * m


def _pad_to(x, shape):
    pads = [(0, t - s) for s, t in zip(x.shape, shape)]
    if all(p == (0, 0) for p in pads):
        return x
    return jnp.pad(x, pads)


def _sdpa_flash_kernel(q_ref, k_ref, v_ref, o_ref, m_sc, l_sc, acc_sc, *,
                       inv_temp, tk, lk_valid, lk_padded):
    # Refs (batch dim squeezed away by BlockSpec):
    #   q_ref: (tq, Dp)   k_ref: (tk, Dp)   v_ref: (tk, Dvp)   o_ref: (tq, Dvp)
    ki = pl.program_id(2)

    @pl.when(ki == 0)
    def _init():
        m_sc[...] = jnp.full(m_sc.shape, _NEG_INF, dtype=m_sc.dtype)
        l_sc[...] = jnp.zeros(l_sc.shape, dtype=l_sc.dtype)
        acc_sc[...] = jnp.zeros(acc_sc.shape, dtype=acc_sc.dtype)

    # Fold 1/temperature into q (tq*D elements) instead of into scores (tq*tk).
    q = q_ref[...] * jnp.asarray(inv_temp, dtype=q_ref.dtype)
    k = k_ref[...]

    # 'qd,kd->qk': contract the last dims directly on the MXU (no k.T relayout),
    # f32 accumulation.
    s = jax.lax.dot_general(
        q, k, dimension_numbers=(((1,), (1,)), ((), ())),
        preferred_element_type=jnp.float32)  # (tq, tk), f32

    if lk_valid < lk_padded:
        # Mask zero-padded kv columns so they don't contribute to the softmax.
        col = ki * tk + jax.lax.broadcasted_iota(jnp.int32, s.shape, 1)
        s = jnp.where(col < lk_valid, s, _NEG_INF)

    # Online softmax update (f32 vector math; correct on v5e too).
    m_prev = m_sc[...]
    m_new = jnp.maximum(m_prev, s.max(axis=-1, keepdims=True))
    alpha = jnp.exp(m_prev - m_new)
    p = jnp.exp(s - m_new)
    l_sc[...] = alpha * l_sc[...] + p.sum(axis=-1, keepdims=True)
    acc_sc[...] = alpha * acc_sc[...] + jnp.dot(
        p.astype(v_ref.dtype), v_ref[...], preferred_element_type=jnp.float32)
    m_sc[...] = m_new

    # TODO(synk): nn.Dropout(p=0.2) is identity in eval mode; training-mode dropout
    # (random mask + 1/(1-p) scaling on the attention weights) is not applied here.

    @pl.when(ki == pl.num_programs(2) - 1)
    def _finalize():
        inv_l = pl.reciprocal(l_sc[...], approx=True)   # EUP vrcp
        o_ref[...] = (acc_sc[...] * inv_l).astype(o_ref.dtype)


def scaled_dot_product_attention(q, k, v, temperature, *, tq=256, tk=256):
    """q: (B, Lq, D), k: (B, Lk, D), v: (B, Lk, Dv) -> (B, Lq, Dv)."""
    B, Lq, D = q.shape
    _, Lk, Dk = k.shape
    _, Lkv, Dv = v.shape
    assert Dk == D and Lkv == Lk

    # Lane-dense feature dims (multiples of 128); sequence tiles aligned to
    # sublane (tq: x8) / lane (tk: x128), clamped to the (padded) extents.
    Dp = _round_up(D, 128)
    Dvp = _round_up(Dv, 128)
    tq = min(tq, _round_up(Lq, 8))
    tk = min(tk, _round_up(Lk, 128))
    Lqp = _round_up(Lq, tq)
    Lkp = _round_up(Lk, tk)

    qp = _pad_to(q, (B, Lqp, Dp))
    kp = _pad_to(k, (B, Lkp, Dp))
    vp = _pad_to(v, (B, Lkp, Dvp))

    kernel = functools.partial(
        _sdpa_flash_kernel,
        inv_temp=float(1.0 / temperature),
        tk=tk,
        lk_valid=Lk,
        lk_padded=Lkp,
    )

    grid = (B, Lqp // tq, Lkp // tk)

    out = pl.pallas_call(
        kernel,
        out_shape=jax.ShapeDtypeStruct((B, Lqp, Dvp), q.dtype),
        grid_spec=pltpu.PrefetchScalarGridSpec(
            num_scalar_prefetch=0,
            grid=grid,
            in_specs=[
                pl.BlockSpec((None, tq, Dp), lambda b, qi, ki: (b, qi, 0)),
                pl.BlockSpec((None, tk, Dp), lambda b, qi, ki: (b, ki, 0)),
                pl.BlockSpec((None, tk, Dvp), lambda b, qi, ki: (b, ki, 0)),
            ],
            out_specs=pl.BlockSpec(
                (None, tq, Dvp), lambda b, qi, ki: (b, qi, 0)),
            scratch_shapes=[
                pltpu.VMEM((tq, 1), jnp.float32),    # running max m
                pltpu.VMEM((tq, 1), jnp.float32),    # running sum l
                pltpu.VMEM((tq, Dvp), jnp.float32),  # output accumulator
            ],
        ),
        compiler_params=pltpu.CompilerParams(
            dimension_semantics=("parallel", "parallel", "arbitrary"),
        ),
    )(qp, kp, vp)

    return out[:, :Lq, :Dv]


def _reference(q, k, v, temperature):
    qf = q.astype(jnp.float32)
    kf = k.astype(jnp.float32)
    vf = v.astype(jnp.float32)
    scores = jnp.einsum("bqd,bkd->bqk", qf, kf) / temperature
    p = jax.nn.softmax(scores, axis=2)
    return jnp.einsum("bqk,bkd->bqd", p, vf)


if __name__ == "__main__":
    key = jax.random.PRNGKey(0)

    # --- Test 1: the module's small shape, f32 (tight tolerance) ---
    kq, kk, kv = jax.random.split(key, 3)
    B, Lq, Lk, D = 2, 8, 8, 32
    temperature = float(D) ** 0.5

    q = jax.random.normal(kq, (B, Lq, D), dtype=jnp.float32)
    k = jax.random.normal(kk, (B, Lk, D), dtype=jnp.float32)
    v = jax.random.normal(kv, (B, Lk, D), dtype=jnp.float32)

    out = jax.block_until_ready(scaled_dot_product_attention(q, k, v, temperature))
    ref = _reference(q, k, v, temperature)
    assert out.shape == (B, Lq, D)
    assert jnp.allclose(out, ref, atol=5e-3, rtol=5e-3), "f32 mismatch vs reference"

    # --- Test 2: ragged lengths + bf16 inputs (exercises tiling, masking, bf16 MXU) ---
    kq2, kk2, kv2 = jax.random.split(jax.random.PRNGKey(1), 3)
    B2, Lq2, Lk2, D2 = 2, 200, 300, 64
    temp2 = float(D2) ** 0.5
    q2 = jax.random.normal(kq2, (B2, Lq2, D2), dtype=jnp.bfloat16)
    k2 = jax.random.normal(kk2, (B2, Lk2, D2), dtype=jnp.bfloat16)
    v2 = jax.random.normal(kv2, (B2, Lk2, D2), dtype=jnp.bfloat16)

    out2 = jax.block_until_ready(scaled_dot_product_attention(q2, k2, v2, temp2))
    ref2 = _reference(q2, k2, v2, temp2)
    assert out2.shape == (B2, Lq2, D2)
    assert jnp.allclose(out2.astype(jnp.float32), ref2, atol=5e-2, rtol=5e-2), \
        "bf16 mismatch vs reference"

    print("KERNEL_OK")
</pallas_src>

<mosaic_0001>
module attributes {stable_mosaic.version = 11 : i64} {
  func.func @_sdpa_flash_kernel(%arg0: i32, %arg1: i32, %arg2: i32, %arg3: memref<1x8x128xf32, #tpu.memory_space<vmem>>, %arg4: memref<1x128x128xf32, #tpu.memory_space<vmem>>, %arg5: memref<1x128x128xf32, #tpu.memory_space<vmem>>, %arg6: memref<1x8x128xf32, #tpu.memory_space<vmem>>, %arg7: memref<8x1xf32, #tpu.memory_space<vmem>>, %arg8: memref<8x1xf32, #tpu.memory_space<vmem>>, %arg9: memref<8x128xf32, #tpu.memory_space<vmem>>) attributes {dimension_semantics = [#tpu.dimension_semantics<parallel>, #tpu.dimension_semantics<parallel>, #tpu.dimension_semantics<arbitrary>], iteration_bounds = array<i64: 2, 1, 1>, scalar_prefetch = 0 : i64, scratch_operands = 3 : i64, tpu.core_type = #tpu.core_type<tc>, window_params = [{transform_indices = @transform_0, window_bounds = array<i64: 1, 8, 128>}, {transform_indices = @transform_1, window_bounds = array<i64: 1, 128, 128>}, {transform_indices = @transform_2, window_bounds = array<i64: 1, 128, 128>}, {transform_indices = @transform_3, window_bounds = array<i64: 1, 8, 128>}]} {
    %c0_i32 = arith.constant 0 : i32
    %0 = arith.cmpi eq, %arg2, %c0_i32 : i32
    %1 = arith.extui %0 : i1 to i32
    %c0_i32_0 = arith.constant 0 : i32
    %2 = arith.cmpi ne, %1, %c0_i32_0 : i32
    scf.if %2 {
      %cst_28 = arith.constant -1.000000e+30 : f32
      %45 = vector.broadcast %cst_28 : f32 to vector<8x1xf32>
      %c0_29 = arith.constant 0 : index
      %c0_30 = arith.constant 0 : index
      %46 = vector.load %arg7[%c0_29, %c0_30] : memref<8x1xf32, #tpu.memory_space<vmem>>, vector<8x1xf32>
      tpu.vector_store %arg7[%c0_29, %c0_30], %45 {strides = array<i32>} : memref<8x1xf32, #tpu.memory_space<vmem>>, vector<8x1xf32>,
      %cst_31 = arith.constant 0.000000e+00 : f32
      %47 = vector.broadcast %cst_31 : f32 to vector<8x1xf32>
      %c0_32 = arith.constant 0 : index
      %c0_33 = arith.constant 0 : index
      %48 = vector.load %arg8[%c0_32, %c0_33] : memref<8x1xf32, #tpu.memory_space<vmem>>, vector<8x1xf32>
      tpu.vector_store %arg8[%c0_32, %c0_33], %47 {strides = array<i32>} : memref<8x1xf32, #tpu.memory_space<vmem>>, vector<8x1xf32>,
      %cst_34 = arith.constant 0.000000e+00 : f32
      %49 = vector.broadcast %cst_34 : f32 to vector<8x128xf32>
      %c0_35 = arith.constant 0 : index
      %c0_36 = arith.constant 0 : index
      %50 = vector.load %arg9[%c0_35, %c0_36] : memref<8x128xf32, #tpu.memory_space<vmem>>, vector<8x128xf32>
      tpu.vector_store %arg9[%c0_35, %c0_36], %49 {strides = array<i32>} : memref<8x128xf32, #tpu.memory_space<vmem>>, vector<8x128xf32>,
    } else {
    }
    %c0 = arith.constant 0 : index
    %c0_1 = arith.constant 0 : index
    %c0_2 = arith.constant 0 : index
    %3 = vector.load %arg3[%c0, %c0_1, %c0_2] : memref<1x8x128xf32, #tpu.memory_space<vmem>>, vector<1x8x128xf32>
    %4 = vector.shape_cast %3 : vector<1x8x128xf32> to vector<8x128xf32>
    %cst = arith.constant 0.176776692 : f32
    %5 = vector.broadcast %cst : f32 to vector<8x128xf32>
    %6 = arith.mulf %4, %5 : vector<8x128xf32>
    %c0_3 = arith.constant 0 : index
    %c0_4 = arith.constant 0 : index
    %c0_5 = arith.constant 0 : index
    %7 = vector.load %arg4[%c0_3, %c0_4, %c0_5] : memref<1x128x128xf32, #tpu.memory_space<vmem>>, vector<1x128x128xf32>
    %8 = vector.shape_cast %7 : vector<1x128x128xf32> to vector<128x128xf32>
    %cst_6 = arith.constant dense<0.000000e+00> : vector<8x128xf32>
    %9 = tpu.matmul %6, %8, %cst_6 {dimension_numbers = #tpu.dot_dimension_numbers<[1], [1], [0], [0], [0, 0, 1, 0], [], []>} : vector<8x128xf32>, vector<128x128xf32>, vector<8x128xf32> -> vector<8x128xf32>
    %c128_i32 = arith.constant 128 : i32
    %10 = arith.muli %arg2, %c128_i32 : i32
    %11 = tpu.iota {dimensions = array<i32: 1>} : vector<8x128xi32>
    %12 = vector.broadcast %10 : i32 to vector<8x128xi32>
    %13 = arith.addi %12, %11 : vector<8x128xi32>
    %c8_i32 = arith.constant 8 : i32
    %14 = vector.broadcast %c8_i32 : i32 to vector<8x128xi32>
    %15 = arith.cmpi slt, %13, %14 : vector<8x128xi32>
    %cst_7 = arith.constant -1.000000e+30 : f32
    %16 = vector.broadcast %cst_7 : f32 to vector<8x128xf32>
    %17 = arith.select %15, %9, %16 : vector<8x128xi1>, vector<8x128xf32>
    %c0_8 = arith.constant 0 : index
    %c0_9 = arith.constant 0 : index
    %18 = vector.load %arg7[%c0_8, %c0_9] : memref<8x1xf32, #tpu.memory_space<vmem>>, vector<8x1xf32>
    %cst_10 = arith.constant dense<0xFF800000> : vector<8xf32>
    %19 = vector.multi_reduction <maximumf>, %17, %cst_10 [1] : vector<8x128xf32> to vector<8xf32>
    %20 = vector.shape_cast %19 : vector<8xf32> to vector<8x1xf32>
    %21 = arith.maximumf %18, %20 : vector<8x1xf32>
    %22 = arith.subf %18, %21 : vector<8x1xf32>
    %23 = math.exp %22 : vector<8x1xf32>
    %24 = vector.broadcast %21 : vector<8x1xf32> to vector<8x128xf32>
    %25 = arith.subf %17, %24 : vector<8x128xf32>
    %26 = math.exp %25 : vector<8x128xf32>
    %c0_11 = arith.constant 0 : index
    %c0_12 = arith.constant 0 : index
    %27 = vector.load %arg8[%c0_11, %c0_12] : memref<8x1xf32, #tpu.memory_space<vmem>>, vector<8x1xf32>
    %28 = arith.mulf %23, %27 : vector<8x1xf32>
    %cst_13 = arith.constant dense<0.000000e+00> : vector<8xf32>
    %29 = vector.multi_reduction <add>, %26, %cst_13 [1] : vector<8x128xf32> to vector<8xf32>
    %30 = vector.shape_cast %29 : vector<8xf32> to vector<8x1xf32>
    %31 = arith.addf %28, %30 : vector<8x1xf32>
    %c0_14 = arith.constant 0 : index
    %c0_15 = arith.constant 0 : index
    %32 = vector.load %arg8[%c0_14, %c0_15] : memref<8x1xf32, #tpu.memory_space<vmem>>, vector<8x1xf32>
    tpu.vector_store %arg8[%c0_14, %c0_15], %31 {strides = array<i32>} : memref<8x1xf32, #tpu.memory_space<vmem>>, vector<8x1xf32>,
    %c0_16 = arith.constant 0 : index
    %c0_17 = arith.constant 0 : index
    %33 = vector.load %arg9[%c0_16, %c0_17] : memref<8x128xf32, #tpu.memory_space<vmem>>, vector<8x128xf32>
    %34 = vector.broadcast %23 : vector<8x1xf32> to vector<8x128xf32>
    %35 = arith.mulf %34, %33 : vector<8x128xf32>
    %c0_18 = arith.constant 0 : index
    %c0_19 = arith.constant 0 : index
    %c0_20 = arith.constant 0 : index
    %36 = vector.load %arg5[%c0_18, %c0_19, %c0_20] : memref<1x128x128xf32, #tpu.memory_space<vmem>>, vector<1x128x128xf32>
    %37 = vector.shape_cast %36 : vector<1x128x128xf32> to vector<128x128xf32>
    %cst_21 = arith.constant dense<0.000000e+00> : vector<8x128xf32>
    %38 = tpu.matmul %26, %37, %cst_21 {dimension_numbers = #tpu.dot_dimension_numbers<[1], [0], [0], [1], [0, 0, 1, 1], [], []>} : vector<8x128xf32>, vector<128x128xf32>, vector<8x128xf32> -> vector<8x128xf32>
    %39 = arith.addf %35, %38 : vector<8x128xf32>
    %c0_22 = arith.constant 0 : index
    %c0_23 = arith.constant 0 : index
    %40 = vector.load %arg9[%c0_22, %c0_23] : memref<8x128xf32, #tpu.memory_space<vmem>>, vector<8x128xf32>
    tpu.vector_store %arg9[%c0_22, %c0_23], %39 {strides = array<i32>} : memref<8x128xf32, #tpu.memory_space<vmem>>, vector<8x128xf32>,
    %c0_24 = arith.constant 0 : index
    %c0_25 = arith.constant 0 : index
    %41 = vector.load %arg7[%c0_24, %c0_25] : memref<8x1xf32, #tpu.memory_space<vmem>>, vector<8x1xf32>
    tpu.vector_store %arg7[%c0_24, %c0_25], %21 {strides = array<i32>} : memref<8x1xf32, #tpu.memory_space<vmem>>, vector<8x1xf32>,
    %c0_i32_26 = arith.constant 0 : i32
    %42 = arith.cmpi eq, %arg2, %c0_i32_26 : i32
    %43 = arith.extui %42 : i1 to i32
    %c0_i32_27 = arith.constant 0 : i32
    %44 = arith.cmpi ne, %43, %c0_i32_27 : i32
    scf.if %44 {
      %c0_28 = arith.constant 0 : index
      %c0_29 = arith.constant 0 : index
      %45 = vector.load %arg8[%c0_28, %c0_29] : memref<8x1xf32, #tpu.memory_space<vmem>>, vector<8x1xf32>
      %46 = tpu.reciprocal %45 {approx = true} : vector<8x1xf32> -> vector<8x1xf32>
      %c0_30 = arith.constant 0 : index
      %c0_31 = arith.constant 0 : index
      %47 = vector.load %arg9[%c0_30, %c0_31] : memref<8x128xf32, #tpu.memory_space<vmem>>, vector<8x128xf32>
      %48 = vector.broadcast %46 : vector<8x1xf32> to vector<8x128xf32>
      %49 = arith.mulf %47, %48 : vector<8x128xf32>
      %c0_32 = arith.constant 0 : index
      %c0_33 = arith.constant 0 : index
      %c0_34 = arith.constant 0 : index
      %50 = vector.load %arg6[%c0_32, %c0_33, %c0_34] : memref<1x8x128xf32, #tpu.memory_space<vmem>>, vector<1x8x128xf32>
      %51 = vector.shape_cast %50 : vector<1x8x128xf32> to vector<8x128xf32>
      %52 = vector.shape_cast %49 : vector<8x128xf32> to vector<1x8x128xf32>
      tpu.vector_store %arg6[%c0_32, %c0_33, %c0_34], %52 {strides = array<i32>} : memref<1x8x128xf32, #tpu.memory_space<vmem>>, vector<1x8x128xf32>,
    } else {
    }
    return
  }
  func.func @transform_0(%arg0: i32, %arg1: i32, %arg2: i32) -> (i32, i32, i32) {
    %c0_i32 = arith.constant 0 : i32
    %c0_i32_0 = arith.constant 0 : i32
    return %arg0, %arg1, %c0_i32 : i32, i32, i32
  }
  func.func @transform_1(%arg0: i32, %arg1: i32, %arg2: i32) -> (i32, i32, i32) {
    %c0_i32 = arith.constant 0 : i32
    %c0_i32_0 = arith.constant 0 : i32
    return %arg0, %arg2, %c0_i32 : i32, i32, i32
  }
  func.func @transform_2(%arg0: i32, %arg1: i32, %arg2: i32) -> (i32, i32, i32) {
    %c0_i32 = arith.constant 0 : i32
    %c0_i32_0 = arith.constant 0 : i32
    return %arg0, %arg2, %c0_i32 : i32, i32, i32
  }
  func.func @transform_3(%arg0: i32, %arg1: i32, %arg2: i32) -> (i32, i32, i32) {
    %c0_i32 = arith.constant 0 : i32
    %c0_i32_0 = arith.constant 0 : i32
    return %arg0, %arg1, %c0_i32 : i32, i32, i32
  }
}

</mosaic_0001>

<llo_original>
// kernel: tpu_custom_call.1
$region0: #{tpu_custom_call.1}
  #allocation0 [shape = 'u32[]', space=smem, size = 0x4, offset = 0x4, fixed_abs, tag = 'smem constant byte address 0x4 - core index']
  #allocation1 [shape = 'u32[72,128]{1,0:T(1,128)}', space=vmem, size = 0x9000, scoped, tag = 'internal scratch']
  #allocation2 [shape = 'f32[8,1]{1,0:T(8,128)}', space=vmem, size = 0x1000, scoped, tag = 'scratch operand']
  #allocation3 [shape = 'f32[8,1]{1,0:T(8,128)}', space=vmem, size = 0x1000, scoped, tag = 'scratch operand']
  #allocation4 [shape = 'f32[8,128]{1,0:T(8,128)}', space=vmem, size = 0x1000, scoped, tag = 'scratch operand']
  %s0 = inlined_call_operand.hbm [shape: f32[2,8,128], index: 0, kind: input, shape index: {}]
  %s1 = inlined_call_operand.hbm [shape: f32[2,128,128], index: 1, kind: input, shape index: {}]
  %s2 = inlined_call_operand.hbm [shape: f32[2,128,128], index: 2, kind: input, shape index: {}]
  %s3 = inlined_call_operand.hbm [shape: f32[2,8,128], index: 3, kind: output, shape index: {}]
  %s4 = sld [smem:[#allocation0]]
  $region65: #{tpu_custom_call.1} parent=0
    _
  %s6 = ssub.s32 1, %s4
  %s7 = scalar_select 0, %s6, %s4
  $region1: #{tpu_custom_call.1} parent=0
    #allocation5 [shape = 'u8[8192]{0}', space=vmem, size = 0x2000, scoped, tag = 'input window, operand 0']
    #allocation6 [shape = 's32[2]{0}', space=sflag, size = 0x8, scoped, tag = 'scoped memory for tpu_custom_call.1']
    #allocation7 [shape = 's32[2]{0}', space=sflag, size = 0x8, scoped, tag = 'scoped memory for tpu_custom_call.1']
    #allocation8 [shape = 'u8[131072]{0}', space=vmem, size = 0x20000, scoped, tag = 'input window, operand 1']
    #allocation9 [shape = 's32[2]{0}', space=sflag, size = 0x8, scoped, tag = 'scoped memory for tpu_custom_call.1']
    #allocation10 [shape = 'u8[131072]{0}', space=vmem, size = 0x20000, scoped, tag = 'input window, operand 2']
    #allocation11 [shape = 'u8[8192]{0}', space=vmem, size = 0x2000, scoped, tag = 'output window, operand 0']
    %8 = vsyncpa [#allocation6], 0
    %s9 = scalar_lea.sflag [#allocation6], 1
    %10 = vsyncpa %s9, 0
    %11 = vsyncpa [#allocation9], 0
    %s12 = scalar_lea.sflag [#allocation9], 1
    %13 = vsyncpa %s12, 0
    %14 = vsyncpa [#allocation7], 0
    %s15 = scalar_lea.sflag [#allocation7], 1
    %16 = vsyncpa %s15, 0
    loop: start=0, step=1, limit=4
    $region2: #{tpu_custom_call.1} parent=1 // loop_pre_header
      _
    $region3: #{tpu_custom_call.1} parent=1 // loop_header
      %s18 = sphi 0, %s22
      %p19 = scmp.ge.s32.totalorder %s18, 4
      %s25 = sphi 0, %s44
      %s26 = sphi 0, %s40
      %s27 = sphi 0, %s36
      %s28 = sphi 0, %s25
      %s29 = sphi 0, %s26
      %s30 = sphi 0, %s27
      %s31 = sphi 0, %s28
      %s32 = sphi 0, %s29
      %s33 = sphi 0, %s30
      %s49 = sphi 0, %s51
      %s52 = sphi 0, %s49
      %s53 = sphi 0, %s52
      %s69 = sphi 0, %s53
      %s77 = sphi 0, %s79
      %s80 = sphi 0, %s77
      %s81 = sphi 0, %s80
      %s97 = sphi 0, %s81
      %s105 = sphi 0, %s107
      %s108 = sphi 0, %s105
      %s109 = sphi 0, %s108
      %s125 = sphi 0, %s109
      %s133 = sphi 0, %s135
      %s136 = sphi 0, %s133
      %s137 = sphi 0, %s136
      %s153 = sphi 0, %s137
    $region4: #{tpu_custom_call.1} parent=1 // loop_header_branch
      %21 = sbr.rel (%p19) target = $region8
    $region5: #{tpu_custom_call.1} parent=1 // loop_body
      %s23 = ssub.s32 %s18, 1
      %s24 = ssub.s32 %s18, 2
      %s34 = sadd.s32 1, %s27
      %p35 = scmp.ge.s32.totalorder %s34, 1
      %s36 = scalar_select %p35, 0, %s34
      %s37 = sadd.s32 1, %s26
      %s38 = scalar_select %p35, %s37, %s26
      %p39 = scmp.ge.s32.totalorder %s38, 1
      %s40 = scalar_select %p39, 0, %s38
      %s41 = sadd.s32 1, %s25
      %s42 = scalar_select %p39, %s41, %s25
      %p43 = scmp.ge.s32.totalorder %s42, 2
      %s44 = scalar_select %p43, 0, %s42
      %s45 = ssub.s32 %s25, %s44
      %s46 = ssub.s32 %s26, %s40
      %s47 = sor.u32 %s45, %s46
      %p48 = scmp.eq.s32.totalorder %s47, 0
      %s50 = sadd.s32 %s49, 1
      %s51 = scalar_select %p48, %s49, %s50
      %p54 = pneg %p48
      %p55 = scmp.eq.s32.totalorder %s18, 1
      %p56 = por %p54, %p55
      %p57 = scmp.ne.s32.totalorder %s49, %s52
      %p58 = scmp.eq.s32.totalorder %s18, 0
      %p59 = por %p57, %p58
      %p60 = scmp.ne.s32.totalorder %s49, %s52
      %p61 = scmp.eq.s32.totalorder %s23, 1
      %p62 = por %p60, %p61
      %p63 = scmp.ne.s32.totalorder %s52, %s53
      %p64 = scmp.eq.s32.totalorder %s23, 0
      %p65 = por %p63, %p64
      %p66 = scmp.ne.s32.totalorder %s52, %s53
      %p67 = scmp.eq.s32.totalorder %s24, 1
      %p68 = por %p66, %p67
      %p70 = scmp.ne.s32.totalorder %s53, %s69
      %p71 = scmp.eq.s32.totalorder %s24, 0
      %p72 = por %p70, %p71
      %s73 = ssub.s32 %s25, %s44
      %s74 = ssub.s32 %s27, %s36
      %s75 = sor.u32 %s73, %s74
      %p76 = scmp.eq.s32.totalorder %s75, 0
      %s78 = sadd.s32 %s77, 1
      %s79 = scalar_select %p76, %s77, %s78
      %p82 = pneg %p76
      %p83 = scmp.eq.s32.totalorder %s18, 1
      %p84 = por %p82, %p83
      %p85 = scmp.ne.s32.totalorder %s77, %s80
      %p86 = scmp.eq.s32.totalorder %s18, 0
      %p87 = por %p85, %p86
      %p88 = scmp.ne.s32.totalorder %s77, %s80
      %p89 = scmp.eq.s32.totalorder %s23, 1
      %p90 = por %p88, %p89
      %p91 = scmp.ne.s32.totalorder %s80, %s81
      %p92 = scmp.eq.s32.totalorder %s23, 0
      %p93 = por %p91, %p92
      %p94 = scmp.ne.s32.totalorder %s80, %s81
      %p95 = scmp.eq.s32.totalorder %s24, 1
      %p96 = por %p94, %p95
      %p98 = scmp.ne.s32.totalorder %s81, %s97
      %p99 = scmp.eq.s32.totalorder %s24, 0
      %p100 = por %p98, %p99
      %s101 = ssub.s32 %s25, %s44
      %s102 = ssub.s32 %s27, %s36
      %s103 = sor.u32 %s101, %s102
      %p104 = scmp.eq.s32.totalorder %s103, 0
      %s106 = sadd.s32 %s105, 1
      %s107 = scalar_select %p104, %s105, %s106
      %p110 = pneg %p104
      %p111 = scmp.eq.s32.totalorder %s18, 1
      %p112 = por %p110, %p111
      %p113 = scmp.ne.s32.totalorder %s105, %s108
      %p114 = scmp.eq.s32.totalorder %s18, 0
      %p115 = por %p113, %p114
      %p116 = scmp.ne.s32.totalorder %s105, %s108
      %p117 = scmp.eq.s32.totalorder %s23, 1
      %p118 = por %p116, %p117
      %p119 = scmp.ne.s32.totalorder %s108, %s109
      %p120 = scmp.eq.s32.totalorder %s23, 0
      %p121 = por %p119, %p120
      %p122 = scmp.ne.s32.totalorder %s108, %s109
      %p123 = scmp.eq.s32.totalorder %s24, 1
      %p124 = por %p122, %p123
      %p126 = scmp.ne.s32.totalorder %s109, %s125
      %p127 = scmp.eq.s32.totalorder %s24, 0
      %p128 = por %p126, %p127
      %s129 = ssub.s32 %s25, %s44
      %s130 = ssub.s32 %s26, %s40
      %s131 = sor.u32 %s129, %s130
      %p132 = scmp.eq.s32.totalorder %s131, 0
      %s134 = sadd.s32 %s133, 1
      %s135 = scalar_select %p132, %s133, %s134
      %p138 = pneg %p132
      %p139 = scmp.eq.s32.totalorder %s18, 1
      %p140 = por %p138, %p139
      %p141 = scmp.ne.s32.totalorder %s133, %s136
      %p142 = scmp.eq.s32.totalorder %s18, 0
      %p143 = por %p141, %p142
      %p144 = scmp.ne.s32.totalorder %s133, %s136
      %p145 = scmp.eq.s32.totalorder %s23, 1
      %p146 = por %p144, %p145
      %p147 = scmp.ne.s32.totalorder %s136, %s137
      %p148 = scmp.eq.s32.totalorder %s23, 0
      %p149 = por %p147, %p148
      %p150 = scmp.ne.s32.totalorder %s136, %s137
      %p151 = scmp.eq.s32.totalorder %s24, 1
      %p152 = por %p150, %p151
      %p154 = scmp.ne.s32.totalorder %s137, %s153
      %p155 = scmp.eq.s32.totalorder %s24, 0
      %p156 = por %p154, %p155
      %p157 = scmp.le.s32.totalorder 1, %s18
      %p158 = scmp.lt.s32.totalorder %s18, 3
      %p159 = pnand %p157, %p158
      %p160 = pneg %p159
      // Predicated region
      $region9: #{tpu_custom_call.1} parent=5 // pred_check
        _
      $region10: #{tpu_custom_call.1} parent=5 // pred_check_branch
        %162 = sbr.rel (%p159) target = $region12
      $region11: #{tpu_custom_call.1} parent=5 // pred_region
        %s163 = ssub.s32 %s18, 1
      $region12: #{tpu_custom_call.1} parent=5 // pred_fallthru
        _
      %p164 = scmp.lt.s32.totalorder %s18, 2
      // Predicated region
      $region13: #{tpu_custom_call.1} parent=5 // pred_check
        %p165 = pneg %p164
      $region14: #{tpu_custom_call.1} parent=5 // pred_check_branch
        %167 = sbr.rel (%p165) target = $region16
      $region15: #{tpu_custom_call.1} parent=5 // pred_region
        // Predicated region
        $region17: #{tpu_custom_call.1} parent=15 // pred_check
          %p168 = pneg %p59
        $region18: #{tpu_custom_call.1} parent=15 // pred_check_branch
          %170 = sbr.rel (%p168) target = $region20
        $region19: #{tpu_custom_call.1} parent=15 // pred_region
          %s171 = sand.u32 %s49, 1
          %s172 = scalar_lea.sflag [#allocation6], %s171
          %s173 = sand.u32 %s49, 1
          %s174 = smul.addr %s173, 8
          %s175 = scalar_lea.vmem [#allocation5], %s174
          %177 = vsyncadd %s172, 0
          %s178 = sadd.s32 %s26, %s25
          %s179 = smul.addr %s178, 8
          %s180 = scalar_lea.hbm %s0, %s179
          %s182 = sshll.u32 %s180, 4
          %s183 = int_to_ptr.hbm [resolvable:$true] %s182
          %s184 = sshll.u32 %s175, 4
          %s185 = int_to_ptr.vmem [resolvable:$true] %s184
          %187 = dma.hbm_to_vmem [thread:$0]  %s183, 128, %s185, %s172
        $region20: #{tpu_custom_call.1} parent=15 // pred_fallthru
          _
        // Predicated region
        $region21: #{tpu_custom_call.1} parent=15 // pred_check
          %p188 = pneg %p87
        $region22: #{tpu_custom_call.1} parent=15 // pred_check_branch
          %190 = sbr.rel (%p188) target = $region24
        $region23: #{tpu_custom_call.1} parent=15 // pred_region
          %s191 = sand.u32 %s18, 1
          %s192 = scalar_lea.sflag [#allocation9], %s191
          %s193 = sand.u32 %s77, 1
          %s194 = smul.addr %s193, 128
          %s195 = scalar_lea.vmem [#allocation8], %s194
          %s196 = smul.u32 16, %s27
          %198 = vsyncadd %s192, 0
          %s199 = smul.addr %s25, 16
          %s200 = sadd.s32 %s196, %s199
          %s201 = smul.addr %s200, 8
          %s202 = scalar_lea.hbm %s1, %s201
          %s203 = sshll.u32 %s202, 4
          %s204 = int_to_ptr.hbm [resolvable:$true] %s203
          %s205 = sshll.u32 %s195, 4
          %s206 = int_to_ptr.vmem [resolvable:$true] %s205
          %211 = dma.hbm_to_vmem [thread:$0]  %s204, 2048, %s206, %s192, 128, 128, 8
        $region24: #{tpu_custom_call.1} parent=15 // pred_fallthru
          _
        // Predicated region
        $region25: #{tpu_custom_call.1} parent=15 // pred_check
          %p212 = pneg %p115
        $region26: #{tpu_custom_call.1} parent=15 // pred_check_branch
          %214 = sbr.rel (%p212) target = $region28
        $region27: #{tpu_custom_call.1} parent=15 // pred_region
          %s215 = sand.u32 %s18, 1
          %s216 = scalar_lea.sflag [#allocation9], %s215
          %s217 = sand.u32 %s105, 1
          %s218 = smul.addr %s217, 128
          %s219 = scalar_lea.vmem [#allocation10], %s218
          %s220 = smul.u32 16, %s27
          %222 = vsyncadd %s216, 0
          %s223 = smul.addr %s25, 16
          %s224 = sadd.s32 %s220, %s223
          %s225 = smul.addr %s224, 8
          %s226 = scalar_lea.hbm %s2, %s225
          %s227 = sshll.u32 %s226, 4
          %s228 = int_to_ptr.hbm [resolvable:$true] %s227
          %s229 = sshll.u32 %s219, 4
          %s230 = int_to_ptr.vmem [resolvable:$true] %s229
          %235 = dma.hbm_to_vmem [thread:$0]  %s228, 2048, %s230, %s216, 128, 128, 8
        $region28: #{tpu_custom_call.1} parent=15 // pred_fallthru
          _
      $region16: #{tpu_custom_call.1} parent=5 // pred_fallthru
        _
      %p236 = scmp.le.s32.totalorder 1, %s18
      %p237 = scmp.lt.s32.totalorder %s18, 3
      %p238 = pnand %p236, %p237
      %p239 = pneg %p238
      // Predicated region
      $region29: #{tpu_custom_call.1} parent=5 // pred_check
        _
      $region30: #{tpu_custom_call.1} parent=5 // pred_check_branch
        %241 = sbr.rel (%p238) target = $region32
      $region31: #{tpu_custom_call.1} parent=5 // pred_region
        %s242 = ssub.s32 %s18, 1
        %s243 = sand.u32 %s52, 1
        %s244 = scalar_lea.sflag [#allocation6], %s243
        %s245 = sand.u32 %s52, 1
        %s246 = smul.addr %s245, 8
        %s247 = scalar_lea.vmem [#allocation5], %s246
        // Predicated region
        $region33: #{tpu_custom_call.1} parent=31 // pred_check
          %p248 = pneg %p65
        $region34: #{tpu_custom_call.1} parent=31 // pred_check_branch
          %250 = sbr.rel (%p248) target = $region36
        $region35: #{tpu_custom_call.1} parent=31 // pred_region
          %252 = dma.done %s244, 128
        $region36: #{tpu_custom_call.1} parent=31 // pred_fallthru
          _
        %s253 = sand.u32 %s23, 1
        %s254 = scalar_lea.sflag [#allocation9], %s253
        %s255 = sand.u32 %s80, 1
        %s256 = smul.addr %s255, 128
        %s257 = scalar_lea.vmem [#allocation8], %s256
        // Predicated region
        $region37: #{tpu_custom_call.1} parent=31 // pred_check
          %p258 = pneg %p93
        $region38: #{tpu_custom_call.1} parent=31 // pred_check_branch
          %260 = sbr.rel (%p258) target = $region40
        $region39: #{tpu_custom_call.1} parent=31 // pred_region
          %262 = dma.done %s254, 2048
        $region40: #{tpu_custom_call.1} parent=31 // pred_fallthru
          _
        %s263 = sand.u32 %s23, 1
        %s264 = scalar_lea.sflag [#allocation9], %s263
        %s265 = sand.u32 %s108, 1
        %s266 = smul.addr %s265, 128
        %s267 = scalar_lea.vmem [#allocation10], %s266
        // Predicated region
        $region41: #{tpu_custom_call.1} parent=31 // pred_check
          %p268 = pneg %p121
        $region42: #{tpu_custom_call.1} parent=31 // pred_check_branch
          %270 = sbr.rel (%p268) target = $region44
        $region43: #{tpu_custom_call.1} parent=31 // pred_region
          %272 = dma.done %s264, 2048
        $region44: #{tpu_custom_call.1} parent=31 // pred_fallthru
          _
        %s273 = sand.u32 %s52, 1
        %s274 = scalar_lea.sflag [#allocation6], %s273
        %s275 = sand.u32 %s52, 1
        %s276 = smul.addr %s275, 8
        %s277 = scalar_lea.vmem [#allocation5], %s276
        %p278 = pneg %p65
        %p279 = pneg %p62
        %s280 = sand.u32 %s23, 1
        %s281 = scalar_lea.sflag [#allocation9], %s280
        %s282 = sand.u32 %s80, 1
        %s283 = smul.addr %s282, 128
        %s284 = scalar_lea.vmem [#allocation8], %s283
        %p285 = pneg %p93
        %p286 = pneg %p90
        %s287 = sand.u32 %s23, 1
        %s288 = scalar_lea.sflag [#allocation9], %s287
        %s289 = sand.u32 %s108, 1
        %s290 = smul.addr %s289, 128
        %s291 = scalar_lea.vmem [#allocation10], %s290
        %p292 = pneg %p121
        %p293 = pneg %p118
        %p294 = pneg %p149
        %p295 = pneg %p146
        %s296 = sand.u32 %s136, 1
        %s297 = scalar_lea.sflag [#allocation7], %s296
        %s298 = sand.u32 %s136, 1
        %s299 = smul.addr %s298, 8
        %s300 = scalar_lea.vmem [#allocation11], %s299
        %s301 = smul.u32 16, %s30
        %s302 = smul.u32 16, %s30
        %p303 = scmp.eq.s32.totalorder %s30, 0
        // Predicated region
        $region45: #{tpu_custom_call.1} parent=31 // pred_check
          %p304 = pneg %p303
        $region46: #{tpu_custom_call.1} parent=31 // pred_check_branch
          %306 = sbr.rel (%p304) target = $region48
        $region47: #{tpu_custom_call.1} parent=31 // pred_region
          %vm307 = vcmask 7168
          %308 = vst.msk [vmem:[#allocation2] sm:$0xff] %vm307, -1e+30
          %309 = vst.msk [vmem:[#allocation3] sm:$0xff] %vm307, 0.0
          %310 = vst [vmem:[#allocation4] sm:$0xff] 0.0
        $region48: #{tpu_custom_call.1} parent=31 // pred_fallthru
          _
        %v311 = vld [vmem:[%s247] sm:$0xff]
        %v312 = vmul.f32 %v311, 0.17677669
        %v313 = vld [vmem:[%s257] sm:$0xff]
        %v314 = vld [vmem:[%s257 + $0x8] sm:$0xff]
        %v315 = vld [vmem:[%s257 + $0x10] sm:$0xff]
        %v316 = vld [vmem:[%s257 + $0x18] sm:$0xff]
        %v317 = vld [vmem:[%s257 + $0x20] sm:$0xff]
        %v318 = vld [vmem:[%s257 + $0x28] sm:$0xff]
        %v319 = vld [vmem:[%s257 + $0x30] sm:$0xff]
        %v320 = vld [vmem:[%s257 + $0x38] sm:$0xff]
        %v321 = vld [vmem:[%s257 + $0x40] sm:$0xff]
        %v322 = vld [vmem:[%s257 + $0x48] sm:$0xff]
        %v323 = vld [vmem:[%s257 + $0x50] sm:$0xff]
        %v324 = vld [vmem:[%s257 + $0x58] sm:$0xff]
        %v325 = vld [vmem:[%s257 + $0x60] sm:$0xff]
        %v326 = vld [vmem:[%s257 + $0x68] sm:$0xff]
        %v327 = vld [vmem:[%s257 + $0x70] sm:$0xff]
        %v328 = vld [vmem:[%s257 + $0x78] sm:$0xff]
        %329 = vmatpush.xpose.msra.mxu0 %v328
        %330 = vmatpush.xpose.msra.mxu0 %v327
        %331 = vmatpush.xpose.msra.mxu0 %v326
        %332 = vmatpush.xpose.msra.mxu0 %v325
        %333 = vmatpush.xpose.msra.mxu0 %v324
        %334 = vmatpush.xpose.msra.mxu0 %v323
        %335 = vmatpush.xpose.msra.mxu0 %v322
        %336 = vmatpush.xpose.msra.mxu0 %v321
        %337 = vmatpush.xpose.msra.mxu0 %v320
        %338 = vmatpush.xpose.msra.mxu0 %v319
        %339 = vmatpush.xpose.msra.mxu0 %v318
        %340 = vmatpush.xpose.msra.mxu0 %v317
        %341 = vmatpush.xpose.msra.mxu0 %v316
        %342 = vmatpush.xpose.msra.mxu0 %v315
        %343 = vmatpush.xpose.msra.mxu0 %v314
        %344 = vmatpush.xpose.msra.mxu0 %v313
        %345 = vmatmul.f32.gmra.mxu0 %v312
        %v346 = vpop.f32.mrf.mxu0
        %v347 = vadd.f32 0.0, %v346
        %348 = vdwg.mxu0
        %s349 = smul.u32 %s30, 128
        %v350 = vlaneseq
        %v351 = vand.u32 %v350, 127
        %v352 = vstv %s349
        %v353 = vadd.s32 %v352, %v351
        %vm354 = vcmp.lt.s32.totalorder %v353, 8
        %v355 = vsel %vm354, %v347, -1e+30
        %v356 = vld [vmem:[#allocation2] sm:$0xff]
        %357 = vmax.xlane.f32.xlu0 %v355
        %v358 = vpop.xlane.xlu0 %357
        %v359 = vmax.f32 %v356, %v358
        %v360 = vsub.f32 %v356, %v359
        %v361 = vmul.f32 %v360, 1.442695
        %v362 = vpow.pop %v361
        %364 = vset.pattern.permute.xlu0 0
        %365 = vperm.xlu0 %364, %v359
        %v366 = vpop.permute.xlu0 %365
        %v368 = vsub.f32 %v355, %v366
        %v369 = vmul.f32 %v368, 1.442695
        %v370 = vpow.pop %v369
        %v371 = vld [vmem:[#allocation3] sm:$0xff]
        %v372 = vmul.f32 %v362, %v371
        %373 = vadd.xlane.f32.xlu0 %v370
        %v374 = vpop.xlane.xlu0 %373
        %v375 = vadd.f32 %v372, %v374
        %vm376 = vcmask 7168
        %377 = vst.msk [vmem:[#allocation3] sm:$0xff] %vm376, %v375
        %v378 = vld [vmem:[#allocation4] sm:$0xff]
        %380 = vset.pattern.permute.xlu0 0
        %381 = vperm.xlu0 %380, %v362
        %v382 = vpop.permute.xlu0 %381
        %v384 = vmul.f32 %v382, %v378
        %v385 = vld [vmem:[%s267] sm:$0xff]
        %v386 = vld [vmem:[%s267 + $0x8] sm:$0xff]
        %v387 = vld [vmem:[%s267 + $0x10] sm:$0xff]
        %v388 = vld [vmem:[%s267 + $0x18] sm:$0xff]
        %v389 = vld [vmem:[%s267 + $0x20] sm:$0xff]
        %v390 = vld [vmem:[%s267 + $0x28] sm:$0xff]
        %v391 = vld [vmem:[%s267 + $0x30] sm:$0xff]
        %v392 = vld [vmem:[%s267 + $0x38] sm:$0xff]
        %v393 = vld [vmem:[%s267 + $0x40] sm:$0xff]
        %v394 = vld [vmem:[%s267 + $0x48] sm:$0xff]
        %v395 = vld [vmem:[%s267 + $0x50] sm:$0xff]
        %v396 = vld [vmem:[%s267 + $0x58] sm:$0xff]
        %v397 = vld [vmem:[%s267 + $0x60] sm:$0xff]
        %v398 = vld [vmem:[%s267 + $0x68] sm:$0xff]
        %v399 = vld [vmem:[%s267 + $0x70] sm:$0xff]
        %v400 = vld [vmem:[%s267 + $0x78] sm:$0xff]
        %401 = vmatpush.msra.mxu0 %v400
        %402 = vmatpush.msra.mxu0 %v399
        %403 = vmatpush.msra.mxu0 %v398
        %404 = vmatpush.msra.mxu0 %v397
        %405 = vmatpush.msra.mxu0 %v396
        %406 = vmatpush.msra.mxu0 %v395
        %407 = vmatpush.msra.mxu0 %v394
        %408 = vmatpush.msra.mxu0 %v393
        %409 = vmatpush.msra.mxu0 %v392
        %410 = vmatpush.msra.mxu0 %v391
        %411 = vmatpush.msra.mxu0 %v390
        %412 = vmatpush.msra.mxu0 %v389
        %413 = vmatpush.msra.mxu0 %v388
        %414 = vmatpush.msra.mxu0 %v387
        %415 = vmatpush.msra.mxu0 %v386
        %416 = vmatpush.msra.mxu0 %v385
        %417 = vmatmul.f32.gmra.mxu0 %v370
        %v418 = vpop.f32.mrf.mxu0
        %v419 = vadd.f32 0.0, %v418
        %420 = vdwg.mxu0
        %v421 = vadd.f32 %v384, %v419
        %422 = vst [vmem:[#allocation4] sm:$0xff] %v421
        %423 = vst.msk [vmem:[#allocation2] sm:$0xff] %vm376, %v359
        // Predicated region
        $region49: #{tpu_custom_call.1} parent=31 // pred_check
          %p424 = pneg %p303
        $region50: #{tpu_custom_call.1} parent=31 // pred_check_branch
          %426 = sbr.rel (%p424) target = $region52
        $region51: #{tpu_custom_call.1} parent=31 // pred_region
          %v427 = vld [vmem:[#allocation3] sm:$0xff]
          %v428 = vrcp.pop %v427
          %v429 = vld [vmem:[#allocation4] sm:$0xff]
          %431 = vset.pattern.permute.xlu0 0
          %432 = vperm.xlu0 %431, %v428
          %v433 = vpop.permute.xlu0 %432
          %v435 = vmul.f32 %v429, %v433
          %436 = vst [vmem:[%s300] sm:$0xff] %v435
        $region52: #{tpu_custom_call.1} parent=31 // pred_fallthru
          _
        %s437 = sand.u32 %s136, 1
        %s438 = scalar_lea.sflag [#allocation7], %s437
        %s439 = sand.u32 %s136, 1
        %s440 = smul.addr %s439, 8
        %s441 = scalar_lea.vmem [#allocation11], %s440
        // Predicated region
        $region53: #{tpu_custom_call.1} parent=31 // pred_check
          %p442 = pneg %p146
        $region54: #{tpu_custom_call.1} parent=31 // pred_check_branch
          %444 = sbr.rel (%p442) target = $region56
        $region55: #{tpu_custom_call.1} parent=31 // pred_region
          %446 = vsyncadd %s438, 0
          %s447 = sadd.s32 %s29, %s28
          %s448 = smul.addr %s447, 8
          %s449 = scalar_lea.hbm %s3, %s448
          %s451 = sshll.u32 %s441, 4
          %s452 = int_to_ptr.vmem [resolvable:$true] %s451
          %s453 = sshll.u32 %s449, 4
          %s454 = int_to_ptr.hbm [resolvable:$true] %s453
          %456 = dma.vmem_to_hbm [thread:$0]  %s452, 128, %s454, %s438
        $region56: #{tpu_custom_call.1} parent=31 // pred_fallthru
          _
      $region32: #{tpu_custom_call.1} parent=5 // pred_fallthru
        _
      %p457 = scmp.le.s32.totalorder 2, %s18
      // Predicated region
      $region57: #{tpu_custom_call.1} parent=5 // pred_check
        %p458 = pneg %p457
      $region58: #{tpu_custom_call.1} parent=5 // pred_check_branch
        %460 = sbr.rel (%p458) target = $region60
      $region59: #{tpu_custom_call.1} parent=5 // pred_region
        %s461 = ssub.s32 %s18, 2
        // Predicated region
        $region61: #{tpu_custom_call.1} parent=59 // pred_check
          %p462 = pneg %p152
        $region62: #{tpu_custom_call.1} parent=59 // pred_check_branch
          %464 = sbr.rel (%p462) target = $region64
        $region63: #{tpu_custom_call.1} parent=59 // pred_region
          %s465 = sand.u32 %s137, 1
          %s466 = scalar_lea.sflag [#allocation7], %s465
          %s467 = sand.u32 %s137, 1
          %s468 = smul.addr %s467, 8
          %s469 = scalar_lea.vmem [#allocation11], %s468
          %471 = dma.done %s466, 128
        $region64: #{tpu_custom_call.1} parent=59 // pred_fallthru
          _
      $region60: #{tpu_custom_call.1} parent=5 // pred_fallthru
        _
    $region6: #{tpu_custom_call.1} parent=1 // loop_footer
      %s22 = sadd.s32 1, %s18
    $region7: #{tpu_custom_call.1} parent=1 // loop_footer_branch
      %17 = sbr.rel target = $region3
    $region8: #{tpu_custom_call.1} parent=1 // loop_exit
      _
    %472 = vsyncpa [#allocation6], 1
    %s473 = scalar_lea.sflag [#allocation6], 1
    %474 = vsyncpa %s473, 1
    %475 = vsyncpa [#allocation9], 1
    %s476 = scalar_lea.sflag [#allocation9], 1
    %477 = vsyncpa %s476, 1
    %478 = vsyncpa [#allocation7], 1
    %s479 = scalar_lea.sflag [#allocation7], 1
    %480 = vsyncpa %s479, 1

</llo_original>
